<compile_context>
chip_gen: v5e
topology: v5e:2x2
jax: 0.10.0
libtpu: 0.0.40
codegen_flags: <defaults>
</compile_context>

<pallas_src>
import functools

import jax
import jax.numpy as jnp
from jax.experimental import pallas as pl
from jax.experimental.pallas import tpu as pltpu

NUM_BITS = 12
HIDDEN_SIZE1 = 256
HIDDEN_SIZE2 = 128
OUTPUT_SIZE = 4
OUTPUT_SIZE_PADDED = 128  # lane-dense output width (multiple of 128)


def fizzbuzz_mlp_kernel(x_ref, w1_ref, b1_ref, w2_ref, b2_ref, w3_ref, b3_ref,
                        o_ref):
    # Layer 1: Linear(12 -> 256) + ReLU.  bf16 MXU inputs, f32 accumulation.
    x = x_ref[...].astype(jnp.bfloat16)
    h1 = jnp.dot(x, w1_ref[...], preferred_element_type=jnp.float32)
    h1 = jnp.maximum(h1 + b1_ref[...], 0.0)
    # (Dropout(0.2) -> identity in eval mode)

    # Layer 2: Linear(256 -> 128) + ReLU.  Dominant FLOPs; bf16 halves the
    # h1 spill traffic and doubles MXU throughput.
    h2 = jnp.dot(h1.astype(jnp.bfloat16), w2_ref[...],
                 preferred_element_type=jnp.float32)
    h2 = jnp.maximum(h2 + b2_ref[...], 0.0)
    # (Dropout(0.2) -> identity in eval mode)

    # Layer 3: Linear(128 -> 4), zero-padded to 128 output lanes so the store
    # is unmasked / lane-dense.
    out = jnp.dot(h2.astype(jnp.bfloat16), w3_ref[...],
                  preferred_element_type=jnp.float32) + b3_ref[...]
    o_ref[...] = out.astype(o_ref.dtype)


@functools.partial(jax.jit, static_argnames=("batch_tile",))
def fizzbuzz_forward(x, params, *, batch_tile=256):
    """x: (B, NUM_BITS) float32.  params: dict (see init_params).

    Returns (B, OUTPUT_SIZE) float32 logits.
    """
    w1, b1, w2, b2, w3, b3 = (params["w1"], params["b1"], params["w2"],
                              params["b2"], params["w3"], params["b3"])
    B = x.shape[0]
    num_tiles = pl.cdiv(B, batch_tile)
    B_pad = num_tiles * batch_tile
    if B_pad != B:
        x = jnp.pad(x, ((0, B_pad - B), (0, 0)))

    const = lambda i: (0, 0)  # weights stay resident across all grid steps

    flops = 2 * B_pad * (NUM_BITS * HIDDEN_SIZE1 +
                         HIDDEN_SIZE1 * HIDDEN_SIZE2 +
                         HIDDEN_SIZE2 * OUTPUT_SIZE_PADDED)
    bytes_accessed = (x.size * 4 + B_pad * OUTPUT_SIZE_PADDED * 4 +
                      w1.size * 2 + w2.size * 2 + w3.size * 2 +
                      (b1.size + b2.size + b3.size) * 4)

    out = pl.pallas_call(
        fizzbuzz_mlp_kernel,
        out_shape=jax.ShapeDtypeStruct((B_pad, OUTPUT_SIZE_PADDED),
                                       jnp.float32),
        grid=(num_tiles,),
        in_specs=[
            pl.BlockSpec((batch_tile, NUM_BITS), lambda i: (i, 0)),
            pl.BlockSpec((NUM_BITS, HIDDEN_SIZE1), const),
            pl.BlockSpec((1, HIDDEN_SIZE1), const),
            pl.BlockSpec((HIDDEN_SIZE1, HIDDEN_SIZE2), const),
            pl.BlockSpec((1, HIDDEN_SIZE2), const),
            pl.BlockSpec((HIDDEN_SIZE2, OUTPUT_SIZE_PADDED), const),
            pl.BlockSpec((1, OUTPUT_SIZE_PADDED), const),
        ],
        out_specs=pl.BlockSpec((batch_tile, OUTPUT_SIZE_PADDED),
                               lambda i: (i, 0)),
        compiler_params=pltpu.CompilerParams(
            dimension_semantics=("parallel",)),
        cost_estimate=pl.CostEstimate(flops=flops, transcendentals=0,
                                      bytes_accessed=bytes_accessed),
    )(x, w1, b1, w2, b2, w3, b3)

    return out[:B, :OUTPUT_SIZE]


def init_params(key):
    """Init matching PyTorch nn.Linear default (U(-k, k), k=1/sqrt(fan_in)).

    Weights are stored transposed as (in_features, out_features) in bf16 (MXU
    inputs); biases are f32 (1, out).  w3/b3 are zero-padded to 128 output
    columns for lane-dense stores.
    """
    def linear(key, fan_in, fan_out):
        kw, kb = jax.random.split(key)
        bound = 1.0 / jnp.sqrt(float(fan_in))
        w = jax.random.uniform(kw, (fan_in, fan_out), jnp.float32,
                               minval=-bound, maxval=bound)
        b = jax.random.uniform(kb, (1, fan_out), jnp.float32,
                               minval=-bound, maxval=bound)
        return w, b

    k1, k2, k3 = jax.random.split(key, 3)
    w1, b1 = linear(k1, NUM_BITS, HIDDEN_SIZE1)
    w2, b2 = linear(k2, HIDDEN_SIZE1, HIDDEN_SIZE2)
    w3, b3 = linear(k3, HIDDEN_SIZE2, OUTPUT_SIZE)

    # Zero-pad layer 3 to 128 output columns (columns >= OUTPUT_SIZE are 0).
    w3 = jnp.pad(w3, ((0, 0), (0, OUTPUT_SIZE_PADDED - OUTPUT_SIZE)))
    b3 = jnp.pad(b3, ((0, 0), (0, OUTPUT_SIZE_PADDED - OUTPUT_SIZE)))

    return dict(w1=w1.astype(jnp.bfloat16), b1=b1,
                w2=w2.astype(jnp.bfloat16), b2=b2,
                w3=w3.astype(jnp.bfloat16), b3=b3)


def reference_forward(x, params):
    """Pure-JAX reference with identical numerics (bf16 dots, f32 accum)."""
    h1 = jnp.maximum(
        jnp.dot(x.astype(jnp.bfloat16), params["w1"],
                preferred_element_type=jnp.float32) + params["b1"], 0.0)
    h2 = jnp.maximum(
        jnp.dot(h1.astype(jnp.bfloat16), params["w2"],
                preferred_element_type=jnp.float32) + params["b2"], 0.0)
    out = jnp.dot(h2.astype(jnp.bfloat16), params["w3"],
                  preferred_element_type=jnp.float32) + params["b3"]
    return out[:, :OUTPUT_SIZE]


if __name__ == "__main__":
    key = jax.random.PRNGKey(0)
    k_in, k_param = jax.random.split(key)

    # FizzBuzz inputs are binary bit encodings of integers; build small
    # deterministic 0/1 bit vectors.  B=500 exercises both the multi-step
    # grid (tile=256) and the padding path (500 -> 512).
    B = 500
    x = (jax.random.uniform(k_in, (B, NUM_BITS)) > 0.5).astype(jnp.float32)

    params = init_params(k_param)

    out = fizzbuzz_forward(x, params, batch_tile=256)
    out = jax.block_until_ready(out)

    ref = reference_forward(x, params)
    assert out.shape == (B, OUTPUT_SIZE), out.shape
    assert jnp.allclose(out, ref, atol=1e-4, rtol=1e-4), "mismatch vs reference"

    print("KERNEL_OK")
</pallas_src>

<mosaic_0001>
module attributes {stable_mosaic.version = 11 : i64} {
  func.func @fizzbuzz_mlp_kernel(%arg0: i32, %arg1: memref<256x12xf32, #tpu.memory_space<vmem>>, %arg2: memref<12x256xbf16, #tpu.memory_space<vmem>>, %arg3: memref<1x256xf32, #tpu.memory_space<vmem>>, %arg4: memref<256x128xbf16, #tpu.memory_space<vmem>>, %arg5: memref<1x128xf32, #tpu.memory_space<vmem>>, %arg6: memref<128x128xbf16, #tpu.memory_space<vmem>>, %arg7: memref<1x128xf32, #tpu.memory_space<vmem>>, %arg8: memref<256x128xf32, #tpu.memory_space<vmem>>) attributes {dimension_semantics = [#tpu.dimension_semantics<parallel>], iteration_bounds = array<i64: 2>, scalar_prefetch = 0 : i64, scratch_operands = 0 : i64, tpu.core_type = #tpu.core_type<tc>, window_params = [{transform_indices = @transform_0, window_bounds = array<i64: 256, 12>}, {pipeline_mode = #tpu.pipeline_mode<synchronous>, transform_indices = @transform_1, window_bounds = array<i64: 12, 256>}, {pipeline_mode = #tpu.pipeline_mode<synchronous>, transform_indices = @transform_2, window_bounds = array<i64: 1, 256>}, {pipeline_mode = #tpu.pipeline_mode<synchronous>, transform_indices = @transform_3, window_bounds = array<i64: 256, 128>}, {pipeline_mode = #tpu.pipeline_mode<synchronous>, transform_indices = @transform_4, window_bounds = array<i64: 1, 128>}, {pipeline_mode = #tpu.pipeline_mode<synchronous>, transform_indices = @transform_5, window_bounds = array<i64: 128, 128>}, {pipeline_mode = #tpu.pipeline_mode<synchronous>, transform_indices = @transform_6, window_bounds = array<i64: 1, 128>}, {transform_indices = @transform_7, window_bounds = array<i64: 256, 128>}]} {
    %c0 = arith.constant 0 : index
    %c0_0 = arith.constant 0 : index
    %0 = vector.load %arg1[%c0, %c0_0] : memref<256x12xf32, #tpu.memory_space<vmem>>, vector<256x12xf32>
    %1 = arith.truncf %0 : vector<256x12xf32> to vector<256x12xbf16>
    %c0_1 = arith.constant 0 : index
    %c0_2 = arith.constant 0 : index
    %2 = vector.load %arg2[%c0_1, %c0_2] : memref<12x256xbf16, #tpu.memory_space<vmem>>, vector<12x256xbf16>
    %cst = arith.constant dense<0.000000e+00> : vector<256x256xf32>
    %3 = tpu.matmul %1, %2, %cst {dimension_numbers = #tpu.dot_dimension_numbers<[1], [0], [0], [1], [0, 0, 1, 1], [], []>} : vector<256x12xbf16>, vector<12x256xbf16>, vector<256x256xf32> -> vector<256x256xf32>
    %c0_3 = arith.constant 0 : index
    %c0_4 = arith.constant 0 : index
    %4 = vector.load %arg3[%c0_3, %c0_4] : memref<1x256xf32, #tpu.memory_space<vmem>>, vector<1x256xf32>
    %5 = vector.broadcast %4 : vector<1x256xf32> to vector<256x256xf32>
    %6 = arith.addf %3, %5 : vector<256x256xf32>
    %cst_5 = arith.constant 0.000000e+00 : f32
    %7 = vector.broadcast %cst_5 : f32 to vector<256x256xf32>
    %8 = arith.maximumf %6, %7 : vector<256x256xf32>
    %9 = arith.truncf %8 : vector<256x256xf32> to vector<256x256xbf16>
    %c0_6 = arith.constant 0 : index
    %c0_7 = arith.constant 0 : index
    %10 = vector.load %arg4[%c0_6, %c0_7] : memref<256x128xbf16, #tpu.memory_space<vmem>>, vector<256x128xbf16>
    %cst_8 = arith.constant dense<0.000000e+00> : vector<256x128xf32>
    %11 = tpu.matmul %9, %10, %cst_8 {dimension_numbers = #tpu.dot_dimension_numbers<[1], [0], [0], [1], [0, 0, 1, 1], [], []>} : vector<256x256xbf16>, vector<256x128xbf16>, vector<256x128xf32> -> vector<256x128xf32>
    %c0_9 = arith.constant 0 : index
    %c0_10 = arith.constant 0 : index
    %12 = vector.load %arg5[%c0_9, %c0_10] : memref<1x128xf32, #tpu.memory_space<vmem>>, vector<1x128xf32>
    %13 = vector.broadcast %12 : vector<1x128xf32> to vector<256x128xf32>
    %14 = arith.addf %11, %13 : vector<256x128xf32>
    %cst_11 = arith.constant 0.000000e+00 : f32
    %15 = vector.broadcast %cst_11 : f32 to vector<256x128xf32>
    %16 = arith.maximumf %14, %15 : vector<256x128xf32>
    %17 = arith.truncf %16 : vector<256x128xf32> to vector<256x128xbf16>
    %c0_12 = arith.constant 0 : index
    %c0_13 = arith.constant 0 : index
    %18 = vector.load %arg6[%c0_12, %c0_13] : memref<128x128xbf16, #tpu.memory_space<vmem>>, vector<128x128xbf16>
    %cst_14 = arith.constant dense<0.000000e+00> : vector<256x128xf32>
    %19 = tpu.matmul %17, %18, %cst_14 {dimension_numbers = #tpu.dot_dimension_numbers<[1], [0], [0], [1], [0, 0, 1, 1], [], []>} : vector<256x128xbf16>, vector<128x128xbf16>, vector<256x128xf32> -> vector<256x128xf32>
    %c0_15 = arith.constant 0 : index
    %c0_16 = arith.constant 0 : index
    %20 = vector.load %arg7[%c0_15, %c0_16] : memref<1x128xf32, #tpu.memory_space<vmem>>, vector<1x128xf32>
    %21 = vector.broadcast %20 : vector<1x128xf32> to vector<256x128xf32>
    %22 = arith.addf %19, %21 : vector<256x128xf32>
    %c0_17 = arith.constant 0 : index
    %c0_18 = arith.constant 0 : index
    %23 = vector.load %arg8[%c0_17, %c0_18] : memref<256x128xf32, #tpu.memory_space<vmem>>, vector<256x128xf32>
    tpu.vector_store %arg8[%c0_17, %c0_18], %22 {strides = array<i32>} : memref<256x128xf32, #tpu.memory_space<vmem>>, vector<256x128xf32>,
    return
  }
  func.func @transform_0(%arg0: i32) -> (i32, i32) {
    %c0_i32 = arith.constant 0 : i32
    %c0_i32_0 = arith.constant 0 : i32
    return %arg0, %c0_i32 : i32, i32
  }
  func.func @transform_1(%arg0: i32) -> (i32, i32) {
    %c0_i32 = arith.constant 0 : i32
    %c0_i32_0 = arith.constant 0 : i32
    %c0_i32_1 = arith.constant 0 : i32
    return %c0_i32, %c0_i32_0 : i32, i32
  }
  func.func @transform_2(%arg0: i32) -> (i32, i32) {
    %c0_i32 = arith.constant 0 : i32
    %c0_i32_0 = arith.constant 0 : i32
    %c0_i32_1 = arith.constant 0 : i32
    return %c0_i32, %c0_i32_0 : i32, i32
  }
  func.func @transform_3(%arg0: i32) -> (i32, i32) {
    %c0_i32 = arith.constant 0 : i32
    %c0_i32_0 = arith.constant 0 : i32
    %c0_i32_1 = arith.constant 0 : i32
    return %c0_i32, %c0_i32_0 : i32, i32
  }
  func.func @transform_4(%arg0: i32) -> (i32, i32) {
    %c0_i32 = arith.constant 0 : i32
    %c0_i32_0 = arith.constant 0 : i32
    %c0_i32_1 = arith.constant 0 : i32
    return %c0_i32, %c0_i32_0 : i32, i32
  }
  func.func @transform_5(%arg0: i32) -> (i32, i32) {
    %c0_i32 = arith.constant 0 : i32
    %c0_i32_0 = arith.constant 0 : i32
    %c0_i32_1 = arith.constant 0 : i32
    return %c0_i32, %c0_i32_0 : i32, i32
  }
  func.func @transform_6(%arg0: i32) -> (i32, i32) {
    %c0_i32 = arith.constant 0 : i32
    %c0_i32_0 = arith.constant 0 : i32
    %c0_i32_1 = arith.constant 0 : i32
    return %c0_i32, %c0_i32_0 : i32, i32
  }
  func.func @transform_7(%arg0: i32) -> (i32, i32) {
    %c0_i32 = arith.constant 0 : i32
    %c0_i32_0 = arith.constant 0 : i32
    return %arg0, %c0_i32 : i32, i32
  }
}

</mosaic_0001>

<llo_original>
// kernel: fizzbuzz_forward.1
$region0: #{fizzbuzz_forward.1}
  #allocation0 [shape = 'u32[]', space=smem, size = 0x4, offset = 0x4, fixed_abs, tag = 'smem constant byte address 0x4 - core index']
  #allocation1 [shape = 'u32[72,128]{1,0:T(1,128)}', space=vmem, size = 0x9000, scoped, tag = 'internal scratch']
  %s0 = inlined_call_operand.vmem [shape: f32[512,12], index: 0, kind: input, shape index: {}]
  %s1 = inlined_call_operand.vmem [shape: bf16[12,256], index: 1, kind: input, shape index: {}]
  %s2 = inlined_call_operand.vmem [shape: f32[1,256], index: 2, kind: input, shape index: {}]
  %s3 = inlined_call_operand.vmem [shape: bf16[256,128], index: 3, kind: input, shape index: {}]
  %s4 = inlined_call_operand.vmem [shape: f32[1,128], index: 4, kind: input, shape index: {}]
  %s5 = inlined_call_operand.vmem [shape: bf16[128,128], index: 5, kind: input, shape index: {}]
  %s6 = inlined_call_operand.vmem [shape: f32[1,128], index: 6, kind: input, shape index: {}]
  %s7 = inlined_call_operand.vmem [shape: f32[512,128], index: 7, kind: output, shape index: {}]
  %s8 = sld [smem:[#allocation0]]
  $region61: #{fizzbuzz_forward.1} parent=0
    _
  %s10 = ssub.s32 1, %s8
  %s11 = scalar_select 0, %s10, %s8
  loop: start=0, step=1, limit=4
  $region2: #{fizzbuzz_forward.1} parent=0 // loop_pre_header
    _
  $region3: #{fizzbuzz_forward.1} parent=0 // loop_header
    %s13 = sphi 0, %s17
    %p14 = scmp.ge.s32.totalorder %s13, 4
    %s23 = sphi 0, %s25
    %s26 = sphi 0, %s23
    %s27 = sphi 0, %s26
    %s43 = sphi 0, %s27
    %s47 = sphi 0, %s47
    %s49 = sphi 0, %s47
    %s50 = sphi 0, %s49
    %s64 = sphi 0, %s50
    %s68 = sphi 0, %s68
    %s70 = sphi 0, %s68
    %s71 = sphi 0, %s70
    %s85 = sphi 0, %s71
    %s89 = sphi 0, %s89
    %s91 = sphi 0, %s89
    %s92 = sphi 0, %s91
    %s106 = sphi 0, %s92
    %s110 = sphi 0, %s110
    %s112 = sphi 0, %s110
    %s113 = sphi 0, %s112
    %s127 = sphi 0, %s113
    %s131 = sphi 0, %s131
    %s133 = sphi 0, %s131
    %s134 = sphi 0, %s133
    %s148 = sphi 0, %s134
    %s152 = sphi 0, %s152
    %s154 = sphi 0, %s152
    %s155 = sphi 0, %s154
    %s169 = sphi 0, %s155
    %s175 = sphi 0, %s177
    %s178 = sphi 0, %s175
    %s179 = sphi 0, %s178
    %s195 = sphi 0, %s179
  $region4: #{fizzbuzz_forward.1} parent=0 // loop_header_branch
    %16 = sbr.rel (%p14) target = $region8
  $region5: #{fizzbuzz_forward.1} parent=0 // loop_body
    %s18 = ssub.s32 %s13, 1
    %s19 = ssub.s32 %s13, 2
    %s20 = sadd.s32 %s13, 1
    %s21 = ssub.s32 %s13, %s20
    %p22 = scmp.eq.s32.totalorder %s21, 0
    %s24 = sadd.s32 %s23, 1
    %s25 = scalar_select %p22, %s23, %s24
    %p28 = pneg %p22
    %p29 = scmp.eq.s32.totalorder %s13, 1
    %p30 = por %p28, %p29
    %p31 = scmp.ne.s32.totalorder %s23, %s26
    %p32 = scmp.eq.s32.totalorder %s13, 0
    %p33 = por %p31, %p32
    %p34 = scmp.ne.s32.totalorder %s23, %s26
    %p35 = scmp.eq.s32.totalorder %s18, 1
    %p36 = por %p34, %p35
    %p37 = scmp.ne.s32.totalorder %s26, %s27
    %p38 = scmp.eq.s32.totalorder %s18, 0
    %p39 = por %p37, %p38
    %p40 = scmp.ne.s32.totalorder %s26, %s27
    %p41 = scmp.eq.s32.totalorder %s19, 1
    %p42 = por %p40, %p41
    %p44 = scmp.ne.s32.totalorder %s27, %s43
    %p45 = scmp.eq.s32.totalorder %s19, 0
    %p46 = por %p44, %p45
    %s48 = sadd.s32 %s47, 1
    %p51 = scmp.eq.s32.totalorder %s13, 1
    %p52 = scmp.ne.s32.totalorder %s47, %s49
    %p53 = scmp.eq.s32.totalorder %s13, 0
    %p54 = por %p52, %p53
    %p55 = scmp.ne.s32.totalorder %s47, %s49
    %p56 = scmp.eq.s32.totalorder %s18, 1
    %p57 = por %p55, %p56
    %p58 = scmp.ne.s32.totalorder %s49, %s50
    %p59 = scmp.eq.s32.totalorder %s18, 0
    %p60 = por %p58, %p59
    %p61 = scmp.ne.s32.totalorder %s49, %s50
    %p62 = scmp.eq.s32.totalorder %s19, 1
    %p63 = por %p61, %p62
    %p65 = scmp.ne.s32.totalorder %s50, %s64
    %p66 = scmp.eq.s32.totalorder %s19, 0
    %p67 = por %p65, %p66
    %s69 = sadd.s32 %s68, 1
    %p72 = scmp.eq.s32.totalorder %s13, 1
    %p73 = scmp.ne.s32.totalorder %s68, %s70
    %p74 = scmp.eq.s32.totalorder %s13, 0
    %p75 = por %p73, %p74
    %p76 = scmp.ne.s32.totalorder %s68, %s70
    %p77 = scmp.eq.s32.totalorder %s18, 1
    %p78 = por %p76, %p77
    %p79 = scmp.ne.s32.totalorder %s70, %s71
    %p80 = scmp.eq.s32.totalorder %s18, 0
    %p81 = por %p79, %p80
    %p82 = scmp.ne.s32.totalorder %s70, %s71
    %p83 = scmp.eq.s32.totalorder %s19, 1
    %p84 = por %p82, %p83
    %p86 = scmp.ne.s32.totalorder %s71, %s85
    %p87 = scmp.eq.s32.totalorder %s19, 0
    %p88 = por %p86, %p87
    %s90 = sadd.s32 %s89, 1
    %p93 = scmp.eq.s32.totalorder %s13, 1
    %p94 = scmp.ne.s32.totalorder %s89, %s91
    %p95 = scmp.eq.s32.totalorder %s13, 0
    %p96 = por %p94, %p95
    %p97 = scmp.ne.s32.totalorder %s89, %s91
    %p98 = scmp.eq.s32.totalorder %s18, 1
    %p99 = por %p97, %p98
    %p100 = scmp.ne.s32.totalorder %s91, %s92
    %p101 = scmp.eq.s32.totalorder %s18, 0
    %p102 = por %p100, %p101
    %p103 = scmp.ne.s32.totalorder %s91, %s92
    %p104 = scmp.eq.s32.totalorder %s19, 1
    %p105 = por %p103, %p104
    %p107 = scmp.ne.s32.totalorder %s92, %s106
    %p108 = scmp.eq.s32.totalorder %s19, 0
    %p109 = por %p107, %p108
    %s111 = sadd.s32 %s110, 1
    %p114 = scmp.eq.s32.totalorder %s13, 1
    %p115 = scmp.ne.s32.totalorder %s110, %s112
    %p116 = scmp.eq.s32.totalorder %s13, 0
    %p117 = por %p115, %p116
    %p118 = scmp.ne.s32.totalorder %s110, %s112
    %p119 = scmp.eq.s32.totalorder %s18, 1
    %p120 = por %p118, %p119
    %p121 = scmp.ne.s32.totalorder %s112, %s113
    %p122 = scmp.eq.s32.totalorder %s18, 0
    %p123 = por %p121, %p122
    %p124 = scmp.ne.s32.totalorder %s112, %s113
    %p125 = scmp.eq.s32.totalorder %s19, 1
    %p126 = por %p124, %p125
    %p128 = scmp.ne.s32.totalorder %s113, %s127
    %p129 = scmp.eq.s32.totalorder %s19, 0
    %p130 = por %p128, %p129
    %s132 = sadd.s32 %s131, 1
    %p135 = scmp.eq.s32.totalorder %s13, 1
    %p136 = scmp.ne.s32.totalorder %s131, %s133
    %p137 = scmp.eq.s32.totalorder %s13, 0
    %p138 = por %p136, %p137
    %p139 = scmp.ne.s32.totalorder %s131, %s133
    %p140 = scmp.eq.s32.totalorder %s18, 1
    %p141 = por %p139, %p140
    %p142 = scmp.ne.s32.totalorder %s133, %s134
    %p143 = scmp.eq.s32.totalorder %s18, 0
    %p144 = por %p142, %p143
    %p145 = scmp.ne.s32.totalorder %s133, %s134
    %p146 = scmp.eq.s32.totalorder %s19, 1
    %p147 = por %p145, %p146
    %p149 = scmp.ne.s32.totalorder %s134, %s148
    %p150 = scmp.eq.s32.totalorder %s19, 0
    %p151 = por %p149, %p150
    %s153 = sadd.s32 %s152, 1
    %p156 = scmp.eq.s32.totalorder %s13, 1
    %p157 = scmp.ne.s32.totalorder %s152, %s154
    %p158 = scmp.eq.s32.totalorder %s13, 0
    %p159 = por %p157, %p158
    %p160 = scmp.ne.s32.totalorder %s152, %s154
    %p161 = scmp.eq.s32.totalorder %s18, 1
    %p162 = por %p160, %p161
    %p163 = scmp.ne.s32.totalorder %s154, %s155
    %p164 = scmp.eq.s32.totalorder %s18, 0
    %p165 = por %p163, %p164
    %p166 = scmp.ne.s32.totalorder %s154, %s155
    %p167 = scmp.eq.s32.totalorder %s19, 1
    %p168 = por %p166, %p167
    %p170 = scmp.ne.s32.totalorder %s155, %s169
    %p171 = scmp.eq.s32.totalorder %s19, 0
    %p172 = por %p170, %p171
    %s173 = ssub.s32 %s13, %s20
    %p174 = scmp.eq.s32.totalorder %s173, 0
    %s176 = sadd.s32 %s175, 1
    %s177 = scalar_select %p174, %s175, %s176
    %p180 = pneg %p174
    %p181 = scmp.eq.s32.totalorder %s13, 1
    %p182 = por %p180, %p181
    %p183 = scmp.ne.s32.totalorder %s175, %s178
    %p184 = scmp.eq.s32.totalorder %s13, 0
    %p185 = por %p183, %p184
    %p186 = scmp.ne.s32.totalorder %s175, %s178
    %p187 = scmp.eq.s32.totalorder %s18, 1
    %p188 = por %p186, %p187
    %p189 = scmp.ne.s32.totalorder %s178, %s179
    %p190 = scmp.eq.s32.totalorder %s18, 0
    %p191 = por %p189, %p190
    %p192 = scmp.ne.s32.totalorder %s178, %s179
    %p193 = scmp.eq.s32.totalorder %s19, 1
    %p194 = por %p192, %p193
    %p196 = scmp.ne.s32.totalorder %s179, %s195
    %p197 = scmp.eq.s32.totalorder %s19, 0
    %p198 = por %p196, %p197
    %p199 = scmp.le.s32.totalorder 1, %s13
    %p200 = scmp.lt.s32.totalorder %s13, 3
    %p201 = pnand %p199, %p200
    %p202 = pneg %p201
    // Predicated region
    $region9: #{fizzbuzz_forward.1} parent=5 // pred_check
      _
    $region10: #{fizzbuzz_forward.1} parent=5 // pred_check_branch
      %204 = sbr.rel (%p201) target = $region12
    $region11: #{fizzbuzz_forward.1} parent=5 // pred_region
      %s205 = ssub.s32 %s13, 1
      // Predicated region
      $region13: #{fizzbuzz_forward.1} parent=11 // pred_check
        %p206 = pneg %p60
      $region14: #{fizzbuzz_forward.1} parent=11 // pred_check_branch
        %208 = sbr.rel (%p206) target = $region16
      $region15: #{fizzbuzz_forward.1} parent=11 // pred_region
        _
      $region16: #{fizzbuzz_forward.1} parent=11 // pred_fallthru
        _
      // Predicated region
      $region17: #{fizzbuzz_forward.1} parent=11 // pred_check
        %p209 = pneg %p81
      $region18: #{fizzbuzz_forward.1} parent=11 // pred_check_branch
        %211 = sbr.rel (%p209) target = $region20
      $region19: #{fizzbuzz_forward.1} parent=11 // pred_region
        _
      $region20: #{fizzbuzz_forward.1} parent=11 // pred_fallthru
        _
      // Predicated region
      $region21: #{fizzbuzz_forward.1} parent=11 // pred_check
        %p212 = pneg %p102
      $region22: #{fizzbuzz_forward.1} parent=11 // pred_check_branch
        %214 = sbr.rel (%p212) target = $region24
      $region23: #{fizzbuzz_forward.1} parent=11 // pred_region
        _
      $region24: #{fizzbuzz_forward.1} parent=11 // pred_fallthru
        _
      // Predicated region
      $region25: #{fizzbuzz_forward.1} parent=11 // pred_check
        %p215 = pneg %p123
      $region26: #{fizzbuzz_forward.1} parent=11 // pred_check_branch
        %217 = sbr.rel (%p215) target = $region28
      $region27: #{fizzbuzz_forward.1} parent=11 // pred_region
        _
      $region28: #{fizzbuzz_forward.1} parent=11 // pred_fallthru
        _
      // Predicated region
      $region29: #{fizzbuzz_forward.1} parent=11 // pred_check
        %p218 = pneg %p144
      $region30: #{fizzbuzz_forward.1} parent=11 // pred_check_branch
        %220 = sbr.rel (%p218) target = $region32
      $region31: #{fizzbuzz_forward.1} parent=11 // pred_region
        _
      $region32: #{fizzbuzz_forward.1} parent=11 // pred_fallthru
        _
      // Predicated region
      $region33: #{fizzbuzz_forward.1} parent=11 // pred_check
        %p221 = pneg %p165
      $region34: #{fizzbuzz_forward.1} parent=11 // pred_check_branch
        %223 = sbr.rel (%p221) target = $region36
      $region35: #{fizzbuzz_forward.1} parent=11 // pred_region
        _
      $region36: #{fizzbuzz_forward.1} parent=11 // pred_fallthru
        _
    $region12: #{fizzbuzz_forward.1} parent=5 // pred_fallthru
      _
    %p224 = scmp.lt.s32.totalorder %s13, 2
    // Predicated region
    $region37: #{fizzbuzz_forward.1} parent=5 // pred_check
      %p225 = pneg %p224
    $region38: #{fizzbuzz_forward.1} parent=5 // pred_check_branch
      %227 = sbr.rel (%p225) target = $region40
    $region39: #{fizzbuzz_forward.1} parent=5 // pred_region
      // Predicated region
      $region41: #{fizzbuzz_forward.1} parent=39 // pred_check
        %p228 = pneg %p33
      $region42: #{fizzbuzz_forward.1} parent=39 // pred_check_branch
        %230 = sbr.rel (%p228) target = $region44
      $region43: #{fizzbuzz_forward.1} parent=39 // pred_region
        %s231 = smul.u32 32, %s13
        %p232 = scmp.lt.s32.totalorder %s231, 63
        %s233 = scalar_select %p232, %s231, 63
        %s234 = smul.addr %s233, 8
        %s235 = scalar_lea.vmem %s0, %s234
        %s236 = smul.u32 32, %s13
      $region44: #{fizzbuzz_forward.1} parent=39 // pred_fallthru
        _
    $region40: #{fizzbuzz_forward.1} parent=5 // pred_fallthru
      _
    %p237 = scmp.le.s32.totalorder 1, %s13
    %p238 = scmp.lt.s32.totalorder %s13, 3
    %p239 = pnand %p237, %p238
    %p240 = pneg %p239
    // Predicated region
    $region45: #{fizzbuzz_forward.1} parent=5 // pred_check
      _
    $region46: #{fizzbuzz_forward.1} parent=5 // pred_check_branch
      %242 = sbr.rel (%p239) target = $region48
    $region47: #{fizzbuzz_forward.1} parent=5 // pred_region
      %s243 = ssub.s32 %s13, 1
      %s244 = smul.u32 32, %s18
      %p245 = scmp.lt.s32.totalorder %s244, 63
      %s246 = scalar_select %p245, %s244, 63
      %s247 = smul.addr %s246, 8
      %s248 = scalar_lea.vmem %s0, %s247
      %p249 = pneg %p39
      %p250 = pneg %p36
      %p251 = pneg %p60
      %p252 = pneg %p57
      %p253 = pneg %p81
      %p254 = pneg %p78
      %p255 = pneg %p102
      %p256 = pneg %p99
      %p257 = pneg %p123
      %p258 = pneg %p120
      %p259 = pneg %p144
      %p260 = pneg %p141
      %p261 = pneg %p165
      %p262 = pneg %p162
      %p263 = pneg %p191
      %p264 = pneg %p188
      %s265 = smul.u32 32, %s18
      %p266 = scmp.lt.s32.totalorder %s265, 63
      %s267 = scalar_select %p266, %s265, 63
      %s268 = smul.addr %s267, 8
      %s269 = scalar_lea.vmem %s7, %s268
      %s270 = smul.u32 32, %s18
      %p271 = scmp.lt.s32.totalorder %s270, 63
      %s272 = scalar_select %p271, %s270, 63
      %s273 = smul.addr %s272, 8
      %s274 = scalar_lea.vmem %s0, %s273
      %s275 = smul.u32 32, %s18
      %s276 = smul.u32 32, %s18
      %p277 = scmp.lt.s32.totalorder %s276, 63
      %s278 = scalar_select %p277, %s276, 63
      %s279 = smul.addr %s278, 8
      %s280 = scalar_lea.vmem %s7, %s279
      %s281 = smul.u32 32, %s18
      %v283 = vld [vmem:[%s274] sm:$0xff]
      %v284 = vld [vmem:[%s274 + $0x8] sm:$0xff]
      %v285 = vld [vmem:[%s274 + $0x10] sm:$0xff]
      %v286 = vld [vmem:[%s274 + $0x18] sm:$0xff]
      %v287 = vld [vmem:[%s274 + $0x20] sm:$0xff]
      %v288 = vld [vmem:[%s274 + $0x28] sm:$0xff]
      %v289 = vld [vmem:[%s274 + $0x30] sm:$0xff]
      %v290 = vld [vmem:[%s274 + $0x38] sm:$0xff]
      %v291 = vld [vmem:[%s274 + $0x40] sm:$0xff]
      %v292 = vld [vmem:[%s274 + $0x48] sm:$0xff]
      %v293 = vld [vmem:[%s274 + $0x50] sm:$0xff]
      %v294 = vld [vmem:[%s274 + $0x58] sm:$0xff]
      %v295 = vld [vmem:[%s274 + $0x60] sm:$0xff]
      %v296 = vld [vmem:[%s274 + $0x68] sm:$0xff]
      %v297 = vld [vmem:[%s274 + $0x70] sm:$0xff]
      %v298 = vld [vmem:[%s274 + $0x78] sm:$0xff]
      %v299 = vld [vmem:[%s274 + $0x80] sm:$0xff]
      %v300 = vld [vmem:[%s274 + $0x88] sm:$0xff]
      %v301 = vld [vmem:[%s274 + $0x90] sm:$0xff]
      %v302 = vld [vmem:[%s274 + $0x98] sm:$0xff]
      %v303 = vld [vmem:[%s274 + $0xa0] sm:$0xff]
      %v304 = vld [vmem:[%s274 + $0xa8] sm:$0xff]
      %v305 = vld [vmem:[%s274 + $0xb0] sm:$0xff]
      %v306 = vld [vmem:[%s274 + $0xb8] sm:$0xff]
      %v307 = vld [vmem:[%s274 + $0xc0] sm:$0xff]
      %v308 = vld [vmem:[%s274 + $0xc8] sm:$0xff]
      %v309 = vld [vmem:[%s274 + $0xd0] sm:$0xff]
      %v310 = vld [vmem:[%s274 + $0xd8] sm:$0xff]
      %v311 = vld [vmem:[%s274 + $0xe0] sm:$0xff]
      %v312 = vld [vmem:[%s274 + $0xe8] sm:$0xff]
      %v313 = vld [vmem:[%s274 + $0xf0] sm:$0xff]
      %v314 = vld [vmem:[%s274 + $0xf8] sm:$0xff]
      %v315 = vpack.c.bf16 %v284, %v283
      %v316 = vpack.c.bf16 %v286, %v285
      %v317 = vpack.c.bf16 %v288, %v287
      %v318 = vpack.c.bf16 %v290, %v289
      %v319 = vpack.c.bf16 %v292, %v291
      %v320 = vpack.c.bf16 %v294, %v293
      %v321 = vpack.c.bf16 %v296, %v295
      %v322 = vpack.c.bf16 %v298, %v297
      %v323 = vpack.c.bf16 %v300, %v299
      %v324 = vpack.c.bf16 %v302, %v301
      %v325 = vpack.c.bf16 %v304, %v303
      %v326 = vpack.c.bf16 %v306, %v305
      %v327 = vpack.c.bf16 %v308, %v307
      %v328 = vpack.c.bf16 %v310, %v309
      %v329 = vpack.c.bf16 %v312, %v311
      %v330 = vpack.c.bf16 %v314, %v313
      %v331 = vld [vmem:[%s1] sm:$0xff]
      %v332 = vld [vmem:[%s1 + $0x8] sm:$0x33]
      %v333 = vld [vmem:[%s2] sm:$0x3]
      %v335 = vperm.slane %v333, 0
      %v336 = vperm.slane %v333, 1
      %v341 = vunpack.c.l.b16 %v331
      %v342 = vunpack.c.h.b16 %v331
      %v343 = vunpack.c.l.b16 %v332
      %v344 = vunpack.c.h.b16 %v332
      %v345 = vpack.c.b16 %v343, %v341
      %v346 = vpack.c.b16 %v344, %v342
      %vm347 = vcmask 97280
      %v349 = vsel %vm347, %v315, 0
      %v352 = vsel %vm347, %v316, 0
      %v355 = vsel %vm347, %v317, 0
      %v358 = vsel %vm347, %v318, 0
      %v361 = vsel %vm347, %v319, 0
      %v364 = vsel %vm347, %v320, 0
      %v367 = vsel %vm347, %v321, 0
      %v370 = vsel %vm347, %v322, 0
      %v373 = vsel %vm347, %v323, 0
      %v376 = vsel %vm347, %v324, 0
      %v379 = vsel %vm347, %v325, 0
      %v382 = vsel %vm347, %v326, 0
      %v385 = vsel %vm347, %v327, 0
      %v388 = vsel %vm347, %v328, 0
      %v391 = vsel %vm347, %v329, 0
      %v394 = vsel %vm347, %v330, 0
      %vm396 = vcmask 1045504
      %v398 = vsel %vm396, %v345, 0
      %v401 = vsel %vm396, %v346, 0
      %403 = vmatpush.bf16.msra.mxu0 0
      %404 = vmatpush.bf16.msra.mxu0 0
      %405 = vmatpush.bf16.msra.mxu0 0
      %406 = vmatpush.bf16.msra.mxu0 0
      %407 = vmatpush.bf16.msra.mxu0 0
      %408 = vmatpush.bf16.msra.mxu0 0
      %409 = vmatpush.bf16.msra.mxu0 0
      %410 = vmatpush.bf16.msra.mxu0 %v398
      %411 = vmatmul.bf16.gmra.mxu0 %v349
      %v412 = vpop.f32.mrf.mxu0
      %v413 = vadd.f32 %v335, %v412
      %v414 = vpop.f32.mrf.mxu0
      %v415 = vadd.f32 %v335, %v414
      %416 = vmatmul.bf16.gmra.mxu0 %v352
      %v417 = vpop.f32.mrf.mxu0
      %v418 = vadd.f32 %v335, %v417
      %v419 = vpop.f32.mrf.mxu0
      %v420 = vadd.f32 %v335, %v419
      %421 = vmatmul.bf16.gmra.mxu0 %v355
      %v422 = vpop.f32.mrf.mxu0
      %v423 = vadd.f32 %v335, %v422
      %v424 = vpop.f32.mrf.mxu0
      %v425 = vadd.f32 %v335, %v424
      %426 = vmatmul.bf16.gmra.mxu0 %v358
      %v427 = vpop.f32.mrf.mxu0
      %v428 = vadd.f32 %v335, %v427
      %v429 = vpop.f32.mrf.mxu0
      %v430 = vadd.f32 %v335, %v429
      %431 = vmatmul.bf16.gmra.mxu0 %v361
      %v432 = vpop.f32.mrf.mxu0
      %v433 = vadd.f32 %v335, %v432
      %v434 = vpop.f32.mrf.mxu0
      %v435 = vadd.f32 %v335, %v434
      %436 = vmatmul.bf16.gmra.mxu0 %v364
      %v437 = vpop.f32.mrf.mxu0
      %v438 = vadd.f32 %v335, %v437
      %v439 = vpop.f32.mrf.mxu0
      %v440 = vadd.f32 %v335, %v439
      %441 = vmatmul.bf16.gmra.mxu0 %v367
      %v442 = vpop.f32.mrf.mxu0
      %v443 = vadd.f32 %v335, %v442
      %v444 = vpop.f32.mrf.mxu0
      %v445 = vadd.f32 %v335, %v444
      %446 = vmatmul.bf16.gmra.mxu0 %v370
      %v447 = vpop.f32.mrf.mxu0
      %v448 = vadd.f32 %v335, %v447
      %v449 = vpop.f32.mrf.mxu0
      %v450 = vadd.f32 %v335, %v449
      %451 = vmatmul.bf16.gmra.mxu0 %v373
      %v452 = vpop.f32.mrf.mxu0
      %v453 = vadd.f32 %v335, %v452
      %v454 = vpop.f32.mrf.mxu0
      %v455 = vadd.f32 %v335, %v454
      %456 = vmatmul.bf16.gmra.mxu0 %v376
      %v457 = vpop.f32.mrf.mxu0
      %v458 = vadd.f32 %v335, %v457
      %v459 = vpop.f32.mrf.mxu0
      %v460 = vadd.f32 %v335, %v459
      %461 = vmatmul.bf16.gmra.mxu0 %v379
      %v462 = vpop.f32.mrf.mxu0
      %v463 = vadd.f32 %v335, %v462
      %v464 = vpop.f32.mrf.mxu0
      %v465 = vadd.f32 %v335, %v464
      %466 = vmatmul.bf16.gmra.mxu0 %v382
      %v467 = vpop.f32.mrf.mxu0
      %v468 = vadd.f32 %v335, %v467
      %v469 = vpop.f32.mrf.mxu0
      %v470 = vadd.f32 %v335, %v469
      %471 = vmatmul.bf16.gmra.mxu0 %v385
      %v472 = vpop.f32.mrf.mxu0
      %v473 = vadd.f32 %v335, %v472
      %v474 = vpop.f32.mrf.mxu0
      %v475 = vadd.f32 %v335, %v474
      %476 = vmatmul.bf16.gmra.mxu0 %v388
      %v477 = vpop.f32.mrf.mxu0
      %v478 = vadd.f32 %v335, %v477
      %v479 = vpop.f32.mrf.mxu0
      %v480 = vadd.f32 %v335, %v479
      %481 = vmatmul.bf16.gmra.mxu0 %v391
      %v482 = vpop.f32.mrf.mxu0
      %v483 = vadd.f32 %v335, %v482
      %v484 = vpop.f32.mrf.mxu0
      %v485 = vadd.f32 %v335, %v484
      %486 = vmatmul.bf16.gmra.mxu0 %v394
      %v487 = vpop.f32.mrf.mxu0
      %v488 = vadd.f32 %v335, %v487
      %v489 = vpop.f32.mrf.mxu0
      %v490 = vadd.f32 %v335, %v489
      %491 = vdwg.mxu0
      %492 = vmatpush.bf16.msra.mxu0 0
      %493 = vmatpush.bf16.msra.mxu0 0
      %494 = vmatpush.bf16.msra.mxu0 0
      %495 = vmatpush.bf16.msra.mxu0 0
      %496 = vmatpush.bf16.msra.mxu0 0
      %497 = vmatpush.bf16.msra.mxu0 0
      %498 = vmatpush.bf16.msra.mxu0 0
      %499 = vmatpush.bf16.msra.mxu0 %v401
      %500 = vmatmul.bf16.gmra.mxu0 %v349
      %v501 = vpop.f32.mrf.mxu0
      %v502 = vadd.f32 %v336, %v501
      %v503 = vpop.f32.mrf.mxu0
      %v504 = vadd.f32 %v336, %v503
      %505 = vmatmul.bf16.gmra.mxu0 %v352
      %v506 = vpop.f32.mrf.mxu0
      %v507 = vadd.f32 %v336, %v506
      %v508 = vpop.f32.mrf.mxu0
      %v509 = vadd.f32 %v336, %v508
      %510 = vmatmul.bf16.gmra.mxu0 %v355
      %v511 = vpop.f32.mrf.mxu0
      %v512 = vadd.f32 %v336, %v511
      %v513 = vpop.f32.mrf.mxu0
      %v514 = vadd.f32 %v336, %v513
      %515 = vmatmul.bf16.gmra.mxu0 %v358
      %v516 = vpop.f32.mrf.mxu0
      %v517 = vadd.f32 %v336, %v516
      %v518 = vpop.f32.mrf.mxu0
      %v519 = vadd.f32 %v336, %v518
      %520 = vmatmul.bf16.gmra.mxu0 %v361
      %v521 = vpop.f32.mrf.mxu0
      %v522 = vadd.f32 %v336, %v521
      %v523 = vpop.f32.mrf.mxu0
      %v524 = vadd.f32 %v336, %v523
      %525 = vmatmul.bf16.gmra.mxu0 %v364
      %v526 = vpop.f32.mrf.mxu0
      %v527 = vadd.f32 %v336, %v526
      %v528 = vpop.f32.mrf.mxu0
      %v529 = vadd.f32 %v336, %v528
      %530 = vmatmul.bf16.gmra.mxu0 %v367
      %v531 = vpop.f32.mrf.mxu0
      %v532 = vadd.f32 %v336, %v531
      %v533 = vpop.f32.mrf.mxu0
      %v534 = vadd.f32 %v336, %v533
      %535 = vmatmul.bf16.gmra.mxu0 %v370
      %v536 = vpop.f32.mrf.mxu0
      %v537 = vadd.f32 %v336, %v536
      %v538 = vpop.f32.mrf.mxu0
      %v539 = vadd.f32 %v336, %v538
      %540 = vmatmul.bf16.gmra.mxu0 %v373
      %v541 = vpop.f32.mrf.mxu0
      %v542 = vadd.f32 %v336, %v541
      %v543 = vpop.f32.mrf.mxu0
      %v544 = vadd.f32 %v336, %v543
      %545 = vmatmul.bf16.gmra.mxu0 %v376
      %v546 = vpop.f32.mrf.mxu0
      %v547 = vadd.f32 %v336, %v546
      %v548 = vpop.f32.mrf.mxu0
      %v549 = vadd.f32 %v336, %v548
      %550 = vmatmul.bf16.gmra.mxu0 %v379
      %v551 = vpop.f32.mrf.mxu0
      %v552 = vadd.f32 %v336, %v551
      %v553 = vpop.f32.mrf.mxu0
      %v554 = vadd.f32 %v336, %v553
      %555 = vmatmul.bf16.gmra.mxu0 %v382
      %v556 = vpop.f32.mrf.mxu0
      %v557 = vadd.f32 %v336, %v556
      %v558 = vpop.f32.mrf.mxu0
      %v559 = vadd.f32 %v336, %v558
      %560 = vmatmul.bf16.gmra.mxu0 %v385
      %v561 = vpop.f32.mrf.mxu0
      %v562 = vadd.f32 %v336, %v561
      %v563 = vpop.f32.mrf.mxu0
      %v564 = vadd.f32 %v336, %v563
      %565 = vmatmul.bf16.gmra.mxu0 %v388
      %v566 = vpop.f32.mrf.mxu0
      %v567 = vadd.f32 %v336, %v566
      %v568 = vpop.f32.mrf.mxu0
      %v569 = vadd.f32 %v336, %v568
      %570 = vmatmul.bf16.gmra.mxu0 %v391
      %v571 = vpop.f32.mrf.mxu0
      %v572 = vadd.f32 %v336, %v571
      %v573 = vpop.f32.mrf.mxu0
      %v574 = vadd.f32 %v336, %v573
      %575 = vmatmul.bf16.gmra.mxu0 %v394
      %v576 = vpop.f32.mrf.mxu0
      %v577 = vadd.f32 %v336, %v576
      %v578 = vpop.f32.mrf.mxu0
      %v579 = vadd.f32 %v336, %v578
      %580 = vdwg.mxu0
      %v581 = vmax.f32 %v413, 0.0
      %v582 = vmax.f32 %v502, 0.0
      %v583 = vmax.f32 %v415, 0.0
      %v584 = vmax.f32 %v504, 0.0
      %v585 = vmax.f32 %v418, 0.0
      %v586 = vmax.f32 %v507, 0.0
      %v587 = vmax.f32 %v420, 0.0
      %v588 = vmax.f32 %v509, 0.0
      %v589 = vmax.f32 %v423, 0.0
      %v590 = vmax.f32 %v512, 0.0
      %v591 = vmax.f32 %v425, 0.0
      %v592 = vmax.f32 %v514, 0.0
      %v593 = vmax.f32 %v428, 0.0
      %v594 = vmax.f32 %v517, 0.0
      %v595 = vmax.f32 %v430, 0.0
      %v596 = vmax.f32 %v519, 0.0
      %v597 = vmax.f32 %v433, 0.0
      %v598 = vmax.f32 %v522, 0.0
      %v599 = vmax.f32 %v435, 0.0
      %v600 = vmax.f32 %v524, 0.0
      %v601 = vmax.f32 %v438, 0.0
      %v602 = vmax.f32 %v527, 0.0
      %v603 = vmax.f32 %v440, 0.0
      %v604 = vmax.f32 %v529, 0.0
      %v605 = vmax.f32 %v443, 0.0
      %v606 = vmax.f32 %v532, 0.0
      %v607 = vmax.f32 %v445, 0.0
      %v608 = vmax.f32 %v534, 0.0
      %v609 = vmax.f32 %v448, 0.0
      %v610 = vmax.f32 %v537, 0.0
      %v611 = vmax.f32 %v450, 0.0
      %v612 = vmax.f32 %v539, 0.0
      %v613 = vmax.f32 %v453, 0.0
      %v614 = vmax.f32 %v542, 0.0
      %v615 = vmax.f32 %v455, 0.0
      %v616 = vmax.f32 %v544, 0.0
      %v617 = vmax.f32 %v458, 0.0
      %v618 = vmax.f32 %v547, 0.0
      %v619 = vmax.f32 %v460, 0.0
      %v620 = vmax.f32 %v549, 0.0
      %v621 = vmax.f32 %v463, 0.0
      %v622 = vmax.f32 %v552, 0.0
      %v623 = vmax.f32 %v465, 0.0
      %v624 = vmax.f32 %v554, 0.0
      %v625 = vmax.f32 %v468, 0.0
      %v626 = vmax.f32 %v557, 0.0
      %v627 = vmax.f32 %v470, 0.0
      %v628 = vmax.f32 %v559, 0.0
      %v629 = vmax.f32 %v473, 0.0
      %v630 = vmax.f32 %v562, 0.0
      %v631 = vmax.f32 %v475, 0.0
      %v632 = vmax.f32 %v564, 0.0
      %v633 = vmax.f32 %v478, 0.0
      %v634 = vmax.f32 %v567, 0.0
      %v635 = vmax.f32 %v480, 0.0
      %v636 = vmax.f32 %v569, 0.0
      %v637 = vmax.f32 %v483, 0.0
      %v638 = vmax.f32 %v572, 0.0
      %v639 = vmax.f32 %v485, 0.0
      %v640 = vmax.f32 %v574, 0.0
      %v641 = vmax.f32 %v488, 0.0
      %v642 = vmax.f32 %v577, 0.0
      %v643 = vmax.f32 %v490, 0.0
      %v644 = vmax.f32 %v579, 0.0
      %v645 = vpack.c.bf16 %v583, %v581
      %v646 = vpack.c.bf16 %v584, %v582
      %v647 = vpack.c.bf16 %v587, %v585
      %v648 = vpack.c.bf16 %v588, %v586
      %v649 = vpack.c.bf16 %v591, %v589
      %v650 = vpack.c.bf16 %v592, %v590
      %v651 = vpack.c.bf16 %v595, %v593
      %v652 = vpack.c.bf16 %v596, %v594
      %v653 = vpack.c.bf16 %v599, %v597
      %v654 = vpack.c.bf16 %v600, %v598
      %v655 = vpack.c.bf16 %v603, %v601
      %v656 = vpack.c.bf16 %v604, %v602
      %v657 = vpack.c.bf16 %v607, %v605
      %v658 = vpack.c.bf16 %v608, %v606
      %v659 = vpack.c.bf16 %v611, %v609
      %v660 = vpack.c.bf16 %v612, %v610
      %v661 = vpack.c.bf16 %v615, %v613
      %v662 = vpack.c.bf16 %v616, %v614
      %v663 = vpack.c.bf16 %v619, %v617
      %v664 = vpack.c.bf16 %v620, %v618
      %v665 = vpack.c.bf16 %v623, %v621
      %v666 = vpack.c.bf16 %v624, %v622
      %v667 = vpack.c.bf16 %v627, %v625
      %v668 = vpack.c.bf16 %v628, %v626
      %v669 = vpack.c.bf16 %v631, %v629
      %v670 = vpack.c.bf16 %v632, %v630
      %v671 = vpack.c.bf16 %v635, %v633
      %v672 = vpack.c.bf16 %v636, %v634
      %v673 = vpack.c.bf16 %v639, %v637
      %v674 = vpack.c.bf16 %v640, %v638
      %v675 = vpack.c.bf16 %v643, %v641
      %v676 = vpack.c.bf16 %v644, %v642
      %v677 = vld [vmem:[%s3] sm:$0xf]
      %v678 = vld [vmem:[%s3 + $0x4] sm:$0xf]
      %v679 = vld [vmem:[%s3 + $0x8] sm:$0xf]
      %v680 = vld [vmem:[%s3 + $0xc] sm:$0xf]
      %v681 = vld [vmem:[%s3 + $0x10] sm:$0xf]
      %v682 = vld [vmem:[%s3 + $0x14] sm:$0xf]
      %v683 = vld [vmem:[%s3 + $0x18] sm:$0xf]
      %v684 = vld [vmem:[%s3 + $0x1c] sm:$0xf]
      %v685 = vld [vmem:[%s3 + $0x20] sm:$0xf]
      %v686 = vld [vmem:[%s3 + $0x24] sm:$0xf]
      %v687 = vld [vmem:[%s3 + $0x28] sm:$0xf]
      %v688 = vld [vmem:[%s3 + $0x2c] sm:$0xf]
      %v689 = vld [vmem:[%s3 + $0x30] sm:$0xf]
      %v690 = vld [vmem:[%s3 + $0x34] sm:$0xf]
      %v691 = vld [vmem:[%s3 + $0x38] sm:$0xf]
      %v692 = vld [vmem:[%s3 + $0x3c] sm:$0xf]
      %v693 = vld [vmem:[%s3 + $0x40] sm:$0xf]
      %v694 = vld [vmem:[%s3 + $0x44] sm:$0xf]
      %v695 = vld [vmem:[%s3 + $0x48] sm:$0xf]
      %v696 = vld [vmem:[%s3 + $0x4c] sm:$0xf]
      %v697 = vld [vmem:[%s3 + $0x50] sm:$0xf]
      %v698 = vld [vmem:[%s3 + $0x54] sm:$0xf]
      %v699 = vld [vmem:[%s3 + $0x58] sm:$0xf]
      %v700 = vld [vmem:[%s3 + $0x5c] sm:$0xf]
      %v701 = vld [vmem:[%s3 + $0x60] sm:$0xf]
      %v702 = vld [vmem:[%s3 + $0x64] sm:$0xf]
      %v703 = vld [vmem:[%s3 + $0x68] sm:$0xf]
      %v704 = vld [vmem:[%s3 + $0x6c] sm:$0xf]
      %v705 = vld [vmem:[%s3 + $0x70] sm:$0xf]
      %v706 = vld [vmem:[%s3 + $0x74] sm:$0xf]
      %v707 = vld [vmem:[%s3 + $0x78] sm:$0xf]
      %v708 = vld [vmem:[%s3 + $0x7c] sm:$0xf]
      %v709 = vld [vmem:[%s4] sm:$0x1]
      %v711 = vperm.slane %v709, 0
      %v745 = vunpack.c.l.b16 %v677
      %v746 = vunpack.c.l.b16 %v678
      %v747 = vunpack.c.l.b16 %v679
      %v748 = vunpack.c.l.b16 %v680
      %v749 = vunpack.c.l.b16 %v681
      %v750 = vunpack.c.l.b16 %v682
      %v751 = vunpack.c.l.b16 %v683
      %v752 = vunpack.c.l.b16 %v684
      %v753 = vunpack.c.l.b16 %v685
      %v754 = vunpack.c.l.b16 %v686
      %v755 = vunpack.c.l.b16 %v687
      %v756 = vunpack.c.l.b16 %v688
      %v757 = vunpack.c.l.b16 %v689
      %v758 = vunpack.c.l.b16 %v690
      %v759 = vunpack.c.l.b16 %v691
      %v760 = vunpack.c.l.b16 %v692
      %v761 = vunpack.c.l.b16 %v693
      %v762 = vunpack.c.l.b16 %v694
      %v763 = vunpack.c.l.b16 %v695
      %v764 = vunpack.c.l.b16 %v696
      %v765 = vunpack.c.l.b16 %v697
      %v766 = vunpack.c.l.b16 %v698
      %v767 = vunpack.c.l.b16 %v699
      %v768 = vunpack.c.l.b16 %v700
      %v769 = vunpack.c.l.b16 %v701
      %v770 = vunpack.c.l.b16 %v702
      %v771 = vunpack.c.l.b16 %v703
      %v772 = vunpack.c.l.b16 %v704
      %v773 = vunpack.c.l.b16 %v705
      %v774 = vunpack.c.l.b16 %v706
      %v775 = vunpack.c.l.b16 %v707
      %v776 = vunpack.c.l.b16 %v708
      %v777 = vpack.c.b16 %v746, %v745
      %v778 = vpack.c.b16 %v748, %v747
      %v779 = vpack.c.b16 %v750, %v749
      %v780 = vpack.c.b16 %v752, %v751
      %v781 = vpack.c.b16 %v754, %v753
      %v782 = vpack.c.b16 %v756, %v755
      %v783 = vpack.c.b16 %v758, %v757
      %v784 = vpack.c.b16 %v760, %v759
      %v785 = vpack.c.b16 %v762, %v761
      %v786 = vpack.c.b16 %v764, %v763
      %v787 = vpack.c.b16 %v766, %v765
      %v788 = vpack.c.b16 %v768, %v767
      %v789 = vpack.c.b16 %v770, %v769
      %v790 = vpack.c.b16 %v772, %v771
      %v791 = vpack.c.b16 %v774, %v773
      %v792 = vpack.c.b16 %v776, %v775
      %809 = vmatpush.bf16.msra.mxu0 %v784
      %810 = vmatpush.bf16.msra.mxu0 %v783
      %811 = vmatpush.bf16.msra.mxu0 %v782
      %812 = vmatpush.bf16.msra.mxu0 %v781
      %813 = vmatpush.bf16.msra.mxu0 %v780
      %814 = vmatpush.bf16.msra.mxu0 %v779
      %815 = vmatpush.bf16.msra.mxu0 %v778
      %816 = vmatpush.bf16.msra.mxu0 %v777
      %817 = vmatmul.bf16.gmra.mxu0 %v645
      %v818 = vpop.f32.mrf.mxu0
      %v819 = vadd.f32 %v711, %v818
      %v820 = vpop.f32.mrf.mxu0
      %v821 = vadd.f32 %v711, %v820
      %822 = vmatmul.bf16.gmra.mxu0 %v647
      %v823 = vpop.f32.mrf.mxu0
      %v824 = vadd.f32 %v711, %v823
      %v825 = vpop.f32.mrf.mxu0
      %v826 = vadd.f32 %v711, %v825
      %827 = vmatmul.bf16.gmra.mxu0 %v649
      %v828 = vpop.f32.mrf.mxu0
      %v829 = vadd.f32 %v711, %v828
      %v830 = vpop.f32.mrf.mxu0
      %v831 = vadd.f32 %v711, %v830
      %832 = vmatmul.bf16.gmra.mxu0 %v651
      %v833 = vpop.f32.mrf.mxu0
      %v834 = vadd.f32 %v711, %v833
      %v835 = vpop.f32.mrf.mxu0
      %v836 = vadd.f32 %v711, %v835
      %837 = vmatmul.bf16.gmra.mxu0 %v653
      %v838 = vpop.f32.mrf.mxu0
      %v839 = vadd.f32 %v711, %v838
      %v840 = vpop.f32.mrf.mxu0
      %v841 = vadd.f32 %v711, %v840
      %842 = vmatmul.bf16.gmra.mxu0 %v655
      %v843 = vpop.f32.mrf.mxu0
      %v844 = vadd.f32 %v711, %v843
      %v845 = vpop.f32.mrf.mxu0
      %v846 = vadd.f32 %v711, %v845
      %847 = vmatmul.bf16.gmra.mxu0 %v657
      %v848 = vpop.f32.mrf.mxu0
      %v849 = vadd.f32 %v711, %v848
      %v850 = vpop.f32.mrf.mxu0
      %v851 = vadd.f32 %v711, %v850
      %852 = vmatmul.bf16.gmra.mxu0 %v659
      %v853 = vpop.f32.mrf.mxu0
      %v854 = vadd.f32 %v711, %v853
      %v855 = vpop.f32.mrf.mxu0
      %v856 = vadd.f32 %v711, %v855
      %857 = vmatmul.bf16.gmra.mxu0 %v661
      %v858 = vpop.f32.mrf.mxu0
      %v859 = vadd.f32 %v711, %v858
      %v860 = vpop.f32.mrf.mxu0
      %v861 = vadd.f32 %v711, %v860
      %862 = vmatmul.bf16.gmra.mxu0 %v663
      %v863 = vpop.f32.mrf.mxu0
      %v864 = vadd.f32 %v711, %v863
      %v865 = vpop.f32.mrf.mxu0
      %v866 = vadd.f32 %v711, %v865
      %867 = vmatmul.bf16.gmra.mxu0 %v665
      %v868 = vpop.f32.mrf.mxu0
      %v869 = vadd.f32 %v711, %v868
      %v870 = vpop.f32.mrf.mxu0
      %v871 = vadd.f32 %v711, %v870
      %872 = vmatmul.bf16.gmra.mxu0 %v667
      %v873 = vpop.f32.mrf.mxu0
      %v874 = vadd.f32 %v711, %v873
      %v875 = vpop.f32.mrf.mxu0
      %v876 = vadd.f32 %v711, %v875
      %877 = vmatmul.bf16.gmra.mxu0 %v669
      %v878 = vpop.f32.mrf.mxu0
      %v879 = vadd.f32 %v711, %v878
      %v880 = vpop.f32.mrf.mxu0
      %v881 = vadd.f32 %v711, %v880
      %882 = vmatmul.bf16.gmra.mxu0 %v671
      %v883 = vpop.f32.mrf.mxu0
      %v884 = vadd.f32 %v711, %v883
      %v885 = vpop.f32.mrf.mxu0
      %v886 = vadd.f32 %v711, %v885
      %887 = vmatmul.bf16.gmra.mxu0 %v673
      %v888 = vpop.f32.mrf.mxu0
      %v889 = vadd.f32 %v711, %v888
      %v890 = vpop.f32.mrf.mxu0
      %v891 = vadd.f32 %v711, %v890
      %892 = vmatmul.bf16.gmra.mxu0 %v675
      %v893 = vpop.f32.mrf.mxu0
      %v894 = vadd.f32 %v711, %v893
      %v895 = vpop.f32.mrf.mxu0
      %v896 = vadd.f32 %v711, %v895
      %897 = vdwg.mxu0
      %898 = vmatpush.bf16.msra.mxu0 %v792
      %899 = vmatpush.bf16.msra.mxu0 %v791
      %900 = vmatpush.bf16.msra.mxu0 %v790
      %901 = vmatpush.bf16.msra.mxu0 %v789
      %902 = vmatpush.bf16.msra.mxu0 %v788
      %903 = vmatpush.bf16.msra.mxu0 %v787
      %904 = vmatpush.bf16.msra.mxu0 %v786
      %905 = vmatpush.bf16.msra.mxu0 %v785
      %906 = vmatmul.bf16.gmra.mxu0 %v646
      %v907 = vpop.f32.mrf.mxu0
      %v908 = vadd.f32 %v819, %v907
      %v909 = vpop.f32.mrf.mxu0
      %v910 = vadd.f32 %v821, %v909
      %911 = vmatmul.bf16.gmra.mxu0 %v648
      %v912 = vpop.f32.mrf.mxu0
      %v913 = vadd.f32 %v824, %v912
      %v914 = vpop.f32.mrf.mxu0
      %v915 = vadd.f32 %v826, %v914
      %916 = vmatmul.bf16.gmra.mxu0 %v650
      %v917 = vpop.f32.mrf.mxu0
      %v918 = vadd.f32 %v829, %v917
      %v919 = vpop.f32.mrf.mxu0
      %v920 = vadd.f32 %v831, %v919
      %921 = vmatmul.bf16.gmra.mxu0 %v652
      %v922 = vpop.f32.mrf.mxu0
      %v923 = vadd.f32 %v834, %v922
      %v924 = vpop.f32.mrf.mxu0
      %v925 = vadd.f32 %v836, %v924
      %926 = vmatmul.bf16.gmra.mxu0 %v654
      %v927 = vpop.f32.mrf.mxu0
      %v928 = vadd.f32 %v839, %v927
      %v929 = vpop.f32.mrf.mxu0
      %v930 = vadd.f32 %v841, %v929
      %931 = vmatmul.bf16.gmra.mxu0 %v656
      %v932 = vpop.f32.mrf.mxu0
      %v933 = vadd.f32 %v844, %v932
      %v934 = vpop.f32.mrf.mxu0
      %v935 = vadd.f32 %v846, %v934
      %936 = vmatmul.bf16.gmra.mxu0 %v658
      %v937 = vpop.f32.mrf.mxu0
      %v938 = vadd.f32 %v849, %v937
      %v939 = vpop.f32.mrf.mxu0
      %v940 = vadd.f32 %v851, %v939
      %941 = vmatmul.bf16.gmra.mxu0 %v660
      %v942 = vpop.f32.mrf.mxu0
      %v943 = vadd.f32 %v854, %v942
      %v944 = vpop.f32.mrf.mxu0
      %v945 = vadd.f32 %v856, %v944
      %946 = vmatmul.bf16.gmra.mxu0 %v662
      %v947 = vpop.f32.mrf.mxu0
      %v948 = vadd.f32 %v859, %v947
      %v949 = vpop.f32.mrf.mxu0
      %v950 = vadd.f32 %v861, %v949
      %951 = vmatmul.bf16.gmra.mxu0 %v664
      %v952 = vpop.f32.mrf.mxu0
      %v953 = vadd.f32 %v864, %v952
      %v954 = vpop.f32.mrf.mxu0
      %v955 = vadd.f32 %v866, %v954
      %956 = vmatmul.bf16.gmra.mxu0 %v666
      %v957 = vpop.f32.mrf.mxu0
      %v958 = vadd.f32 %v869, %v957
      %v959 = vpop.f32.mrf.mxu0
      %v960 = vadd.f32 %v871, %v959
      %961 = vmatmul.bf16.gmra.mxu0 %v668
      %v962 = vpop.f32.mrf.mxu0
      %v963 = vadd.f32 %v874, %v962
      %v964 = vpop.f32.mrf.mxu0
      %v965 = vadd.f32 %v876, %v964
      %966 = vmatmul.bf16.gmra.mxu0 %v670
      %v967 = vpop.f32.mrf.mxu0
      %v968 = vadd.f32 %v879, %v967
      %v969 = vpop.f32.mrf.mxu0
      %v970 = vadd.f32 %v881, %v969
      %971 = vmatmul.bf16.gmra.mxu0 %v672
      %v972 = vpop.f32.mrf.mxu0
      %v973 = vadd.f32 %v884, %v972
      %v974 = vpop.f32.mrf.mxu0
      %v975 = vadd.f32 %v886, %v974
      %976 = vmatmul.bf16.gmra.mxu0 %v674
      %v977 = vpop.f32.mrf.mxu0
      %v978 = vadd.f32 %v889, %v977
      %v979 = vpop.f32.mrf.mxu0
      %v980 = vadd.f32 %v891, %v979
      %981 = vmatmul.bf16.gmra.mxu0 %v676
      %v982 = vpop.f32.mrf.mxu0
      %v983 = vadd.f32 %v894, %v982
      %v984 = vpop.f32.mrf.mxu0
      %v985 = vadd.f32 %v896, %v984
      %986 = vdwg.mxu0
      %v987 = vmax.f32 %v908, 0.0
      %v988 = vmax.f32 %v910, 0.0
      %v989 = vmax.f32 %v913, 0.0
      %v990 = vmax.f32 %v915, 0.0
      %v991 = vmax.f32 %v918, 0.0
      %v992 = vmax.f32 %v920, 0.0
      %v993 = vmax.f32 %v923, 0.0
      %v994 = vmax.f32 %v925, 0.0
      %v995 = vmax.f32 %v928, 0.0
      %v996 = vmax.f32 %v930, 0.0
      %v997 = vmax.f32 %v933, 0.0
      %v998 = vmax.f32 %v935, 0.0
      %v999 = vmax.f32 %v938, 0.0
      %v1000 = vmax.f32 %v940, 0.0
      %v1001 = vmax.f32 %v943, 0.0
      %v1002 = vmax.f32 %v945, 0.0
      %v1003 = vmax.f32 %v948, 0.0
      %v1004 = vmax.f32 %v950, 0.0
      %v1005 = vmax.f32 %v953, 0.0
      %v1006 = vmax.f32 %v955, 0.0
      %v1007 = vmax.f32 %v958, 0.0
      %v1008 = vmax.f32 %v960, 0.0
      %v1009 = vmax.f32 %v963, 0.0
      %v1010 = vmax.f32 %v965, 0.0
      %v1011 = vmax.f32 %v968, 0.0
      %v1012 = vmax.f32 %v970, 0.0
      %v1013 = vmax.f32 %v973, 0.0
      %v1014 = vmax.f32 %v975, 0.0
      %v1015 = vmax.f32 %v978, 0.0
      %v1016 = vmax.f32 %v980, 0.0
      %v1017 = vmax.f32 %v983, 0.0
      %v1018 = vmax.f32 %v985, 0.0
      %v1019 = vpack.c.bf16 %v988, %v987
      %v1020 = vpack.c.bf16 %v990, %v989
      %v1021 = vpack.c.bf16 %v992, %v991
      %v1022 = vpack.c.bf16 %v994, %v993
      %v1023 = vpack.c.bf16 %v996, %v995
      %v1024 = vpack.c.bf16 %v998, %v997
      %v1025 = vpack.c.bf16 %v1000, %v999
      %v1026 = vpack.c.bf16 %v1002, %v1001
      %v1027 = vpack.c.bf16 %v1004, %v1003
      %v1028 = vpack.c.bf16 %v1006, %v1005
      %v1029 = vpack.c.bf16 %v1008, %v1007
      %v1030 = vpack.c.bf16 %v1010, %v1009
      %v1031 = vpack.c.bf16 %v1012, %v1011
      %v1032 = vpack.c.bf16 %v1014, %v1013
      %v1033 = vpack.c.bf16 %v1016, %v1015
      %v1034 = vpack.c.bf16 %v1018, %v1017
      %v1035 = vld [vmem:[%s5] sm:$0xf]
      %v1036 = vld [vmem:[%s5 + $0x4] sm:$0xf]
      %v1037 = vld [vmem:[%s5 + $0x8] sm:$0xf]
      %v1038 = vld [vmem:[%s5 + $0xc] sm:$0xf]
      %v1039 = vld [vmem:[%s5 + $0x10] sm:$0xf]
      %v1040 = vld [vmem:[%s5 + $0x14] sm:$0xf]
      %v1041 = vld [vmem:[%s5 + $0x18] sm:$0xf]
      %v1042 = vld [vmem:[%s5 + $0x1c] sm:$0xf]
      %v1043 = vld [vmem:[%s5 + $0x20] sm:$0xf]
      %v1044 = vld [vmem:[%s5 + $0x24] sm:$0xf]
      %v1045 = vld [vmem:[%s5 + $0x28] sm:$0xf]
      %v1046 = vld [vmem:[%s5 + $0x2c] sm:$0xf]
      %v1047 = vld [vmem:[%s5 + $0x30] sm:$0xf]
      %v1048 = vld [vmem:[%s5 + $0x34] sm:$0xf]
      %v1049 = vld [vmem:[%s5 + $0x38] sm:$0xf]
      %v1050 = vld [vmem:[%s5 + $0x3c] sm:$0xf]
      %v1051 = vld [vmem:[%s6] sm:$0x1]
      %v1053 = vperm.slane %v1051, 0
      %v1071 = vunpack.c.l.b16 %v1035
      %v1072 = vunpack.c.l.b16 %v1036
      %v1073 = vunpack.c.l.b16 %v1037
      %v1074 = vunpack.c.l.b16 %v1038
      %v1075 = vunpack.c.l.b16 %v1039
      %v1076 = vunpack.c.l.b16 %v1040
      %v1077 = vunpack.c.l.b16 %v1041
      %v1078 = vunpack.c.l.b16 %v1042
      %v1079 = vunpack.c.l.b16 %v1043
      %v1080 = vunpack.c.l.b16 %v1044
      %v1081 = vunpack.c.l.b16 %v1045
      %v1082 = vunpack.c.l.b16 %v1046
      %v1083 = vunpack.c.l.b16 %v1047
      %v1084 = vunpack.c.l.b16 %v1048
      %v1085 = vunpack.c.l.b16 %v1049
      %v1086 = vunpack.c.l.b16 %v1050
      %v1087 = vpack.c.b16 %v1072, %v1071
      %v1088 = vpack.c.b16 %v1074, %v1073
      %v1089 = vpack.c.b16 %v1076, %v1075
      %v1090 = vpack.c.b16 %v1078, %v1077
      %v1091 = vpack.c.b16 %v1080, %v1079
      %v1092 = vpack.c.b16 %v1082, %v1081
      %v1093 = vpack.c.b16 %v1084, %v1083
      %v1094 = vpack.c.b16 %v1086, %v1085
      %1103 = vmatpush.bf16.msra.mxu0 %v1094
      %1104 = vmatpush.bf16.msra.mxu0 %v1093
      %1105 = vmatpush.bf16.msra.mxu0 %v1092
      %1106 = vmatpush.bf16.msra.mxu0 %v1091
      %1107 = vmatpush.bf16.msra.mxu0 %v1090
      %1108 = vmatpush.bf16.msra.mxu0 %v1089
      %1109 = vmatpush.bf16.msra.mxu0 %v1088
      %1110 = vmatpush.bf16.msra.mxu0 %v1087
      %1111 = vmatmul.bf16.gmra.mxu0 %v1019
      %v1112 = vpop.f32.mrf.mxu0
      %v1113 = vadd.f32 %v1053, %v1112
      %v1114 = vpop.f32.mrf.mxu0
      %v1115 = vadd.f32 %v1053, %v1114
      %1116 = vmatmul.bf16.gmra.mxu0 %v1020
      %v1117 = vpop.f32.mrf.mxu0
      %v1118 = vadd.f32 %v1053, %v1117
      %v1119 = vpop.f32.mrf.mxu0
      %v1120 = vadd.f32 %v1053, %v1119
      %1121 = vmatmul.bf16.gmra.mxu0 %v1021
      %v1122 = vpop.f32.mrf.mxu0
      %v1123 = vadd.f32 %v1053, %v1122
      %v1124 = vpop.f32.mrf.mxu0
      %v1125 = vadd.f32 %v1053, %v1124
      %1126 = vmatmul.bf16.gmra.mxu0 %v1022
      %v1127 = vpop.f32.mrf.mxu0
      %v1128 = vadd.f32 %v1053, %v1127
      %v1129 = vpop.f32.mrf.mxu0
      %v1130 = vadd.f32 %v1053, %v1129
      %1131 = vmatmul.bf16.gmra.mxu0 %v1023
      %v1132 = vpop.f32.mrf.mxu0
      %v1133 = vadd.f32 %v1053, %v1132
      %v1134 = vpop.f32.mrf.mxu0
      %v1135 = vadd.f32 %v1053, %v1134
      %1136 = vmatmul.bf16.gmra.mxu0 %v1024
      %v1137 = vpop.f32.mrf.mxu0
      %v1138 = vadd.f32 %v1053, %v1137
      %v1139 = vpop.f32.mrf.mxu0
      %v1140 = vadd.f32 %v1053, %v1139
      %1141 = vmatmul.bf16.gmra.mxu0 %v1025
      %v1142 = vpop.f32.mrf.mxu0
      %v1143 = vadd.f32 %v1053, %v1142
      %v1144 = vpop.f32.mrf.mxu0
      %v1145 = vadd.f32 %v1053, %v1144
      %1146 = vmatmul.bf16.gmra.mxu0 %v1026
      %v1147 = vpop.f32.mrf.mxu0
      %v1148 = vadd.f32 %v1053, %v1147
      %v1149 = vpop.f32.mrf.mxu0
      %v1150 = vadd.f32 %v1053, %v1149
      %1151 = vmatmul.bf16.gmra.mxu0 %v1027
      %v1152 = vpop.f32.mrf.mxu0
      %v1153 = vadd.f32 %v1053, %v1152
      %v1154 = vpop.f32.mrf.mxu0
      %v1155 = vadd.f32 %v1053, %v1154
      %1156 = vmatmul.bf16.gmra.mxu0 %v1028
      %v1157 = vpop.f32.mrf.mxu0
      %v1158 = vadd.f32 %v1053, %v1157
      %v1159 = vpop.f32.mrf.mxu0
      %v1160 = vadd.f32 %v1053, %v1159
      %1161 = vmatmul.bf16.gmra.mxu0 %v1029
      %v1162 = vpop.f32.mrf.mxu0
      %v1163 = vadd.f32 %v1053, %v1162
      %v1164 = vpop.f32.mrf.mxu0
      %v1165 = vadd.f32 %v1053, %v1164
      %1166 = vmatmul.bf16.gmra.mxu0 %v1030
      %v1167 = vpop.f32.mrf.mxu0
      %v1168 = vadd.f32 %v1053, %v1167
      %v1169 = vpop.f32.mrf.mxu0
      %v1170 = vadd.f32 %v1053, %v1169
      %1171 = vmatmul.bf16.gmra.mxu0 %v1031
      %v1172 = vpop.f32.mrf.mxu0
      %v1173 = vadd.f32 %v1053, %v1172
      %v1174 = vpop.f32.mrf.mxu0
      %v1175 = vadd.f32 %v1053, %v1174
      %1176 = vmatmul.bf16.gmra.mxu0 %v1032
      %v1177 = vpop.f32.mrf.mxu0
      %v1178 = vadd.f32 %v1053, %v1177
      %v1179 = vpop.f32.mrf.mxu0
      %v1180 = vadd.f32 %v1053, %v1179
      %1181 = vmatmul.bf16.gmra.mxu0 %v1033
      %v1182 = vpop.f32.mrf.mxu0
      %v1183 = vadd.f32 %v1053, %v1182
      %v1184 = vpop.f32.mrf.mxu0
      %v1185 = vadd.f32 %v1053, %v1184
      %1186 = vmatmul.bf16.gmra.mxu0 %v1034
      %v1187 = vpop.f32.mrf.mxu0
      %v1188 = vadd.f32 %v1053, %v1187
      %v1189 = vpop.f32.mrf.mxu0
      %v1190 = vadd.f32 %v1053, %v1189
      %1191 = vdwg.mxu0
      %1192 = vst [vmem:[%s280] sm:$0xff] %v1113
      %1193 = vst [vmem:[%s280 + $0x8] sm:$0xff] %v1115
      %1194 = vst [vmem:[%s280 + $0x10] sm:$0xff] %v1118
      %1195 = vst [vmem:[%s280 + $0x18] sm:$0xff] %v1120
      %1196 = vst [vmem:[%s280 + $0x20] sm:$0xff] %v1123
      %1197 = vst [vmem:[%s280 + $0x28] sm:$0xff] %v1125
      %1198 = vst [vmem:[%s280 + $0x30] sm:$0xff] %v1128
      %1199 = vst [vmem:[%s280 + $0x38] sm:$0xff] %v1130
      %1200 = vst [vmem:[%s280 + $0x40] sm:$0xff] %v1133
      %1201 = vst [vmem:[%s280 + $0x48] sm:$0xff] %v1135
      %1202 = vst [vmem:[%s280 + $0x50] sm:$0xff] %v1138
      %1203 = vst [vmem:[%s280 + $0x58] sm:$0xff] %v1140
      %1204 = vst [vmem:[%s280 + $0x60] sm:$0xff] %v1143
      %1205 = vst [vmem:[%s280 + $0x68] sm:$0xff] %v1145
      %1206 = vst [vmem:[%s280 + $0x70] sm:$0xff] %v1148
      %1207 = vst [vmem:[%s280 + $0x78] sm:$0xff] %v1150
      %1208 = vst [vmem:[%s280 + $0x80] sm:$0xff] %v1153
      %1209 = vst [vmem:[%s280 + $0x88] sm:$0xff] %v1155
      %1210 = vst [vmem:[%s280 + $0x90] sm:$0xff] %v1158
      %1211 = vst [vmem:[%s280 + $0x98] sm:$0xff] %v1160
      %1212 = vst [vmem:[%s280 + $0xa0] sm:$0xff] %v1163
      %1213 = vst [vmem:[%s280 + $0xa8] sm:$0xff] %v1165
      %1214 = vst [vmem:[%s280 + $0xb0] sm:$0xff] %v1168
      %1215 = vst [vmem:[%s280 + $0xb8] sm:$0xff] %v1170
      %1216 = vst [vmem:[%s280 + $0xc0] sm:$0xff] %v1173
      %1217 = vst [vmem:[%s280 + $0xc8] sm:$0xff] %v1175
      %1218 = vst [vmem:[%s280 + $0xd0] sm:$0xff] %v1178
      %1219 = vst [vmem:[%s280 + $0xd8] sm:$0xff] %v1180
      %1220 = vst [vmem:[%s280 + $0xe0] sm:$0xff] %v1183
      %1221 = vst [vmem:[%s280 + $0xe8] sm:$0xff] %v1185
      %1222 = vst [vmem:[%s280 + $0xf0] sm:$0xff] %v1188
      %1223 = vst [vmem:[%s280 + $0xf8] sm:$0xff] %v1190
      %s1224 = smul.u32 32, %s18
      %p1225 = scmp.lt.s32.totalorder %s1224, 63
      %s1226 = scalar_select %p1225, %s1224, 63
      %s1227 = smul.addr %s1226, 8
      %s1228 = scalar_lea.vmem %s7, %s1227
      // Predicated region
      $region49: #{fizzbuzz_forward.1} parent=47 // pred_check
        %p1229 = pneg %p188
      $region50: #{fizzbuzz_forward.1} parent=47 // pred_check_branch
        %1231 = sbr.rel (%p1229) target = $region52
      $region51: #{fizzbuzz_forward.1} parent=47 // pred_region
        %s1232 = smul.u32 32, %s18
      $region52: #{fizzbuzz_forward.1} parent=47 // pred_fallthru
        _
    $region48: #{fizzbuzz_forward.1} parent=5 // pred_fallthru
      _
    %p1233 = scmp.le.s32.totalorder 2, %s13
    // Predicated region
    $region53: #{fizzbuzz_forward.1} parent=5 // pred_check
      %p1234 = pneg %p1233
    $region54: #{fizzbuzz_forward.1} parent=5 // pred_check_branch
      %1236 = sbr.rel (%p1234) target = $region56
    $region55: #{fizzbuzz_forward.1} parent=5 // pred_region
      %s1237 = ssub.s32 %s13, 2
      // Predicated region
      $region57: #{fizzbuzz_forward.1} parent=55 // pred_check
        %p1238 = pneg %p194
      $region58: #{fizzbuzz_forward.1} parent=55 // pred_check_branch
        %1240 = sbr.rel (%p1238) target = $region60
      $region59: #{fizzbuzz_forward.1} parent=55 // pred_region
        %s1241 = smul.u32 32, %s19
        %p1242 = scmp.lt.s32.totalorder %s1241, 63
        %s1243 = scalar_select %p1242, %s1241, 63
        %s1244 = smul.addr %s1243, 8
        %s1245 = scalar_lea.vmem %s7, %s1244
      $region60: #{fizzbuzz_forward.1} parent=55 // pred_fallthru
        _
    $region56: #{fizzbuzz_forward.1} parent=5 // pred_fallthru
      _
  $region6: #{fizzbuzz_forward.1} parent=0 // loop_footer
    %s17 = sadd.s32 1, %s13
  $region7: #{fizzbuzz_forward.1} parent=0 // loop_footer_branch
    %12 = sbr.rel target = $region3
  $region8: #{fizzbuzz_forward.1} parent=0 // loop_exit
    _

</llo_original>
